<compile_context>
chip_gen: v7x
topology: tpu7x:2x2x1
jax: 0.10.0
libtpu: 0.0.40
codegen_flags: <defaults>
</compile_context>

<pallas_src>
import jax
import jax.numpy as jnp
from jax.experimental import pallas as pl
from jax.experimental.pallas import tpu as pltpu

FEAT = 20        # hidden width of the MLP
LANE_TILE = 256  # round batch tiles to this (MXU-friendly on v6e/v7x, 2x128 lanes)
MAX_TN = 2048    # max lane tile; (20, 2048) f32 activations ~160 KiB << VMEM


def _net_kernel(x_ref, wh_ref, vec_ref, o_ref):
    """Fused 5-layer MLP on one (feature, batch) tile.

    x_ref  : (1, TN)          collocation points for this tile
    wh_ref : (3, 20, 20)      hidden weights W2..W4 in (out, in) layout
    vec_ref: (20, 8)          packed columns [w1, b1, b2, b3, b4, w5, b5, pad]
    o_ref  : (1, TN)          network output for this tile
    """
    x = x_ref[...]                       # (1, TN)
    vec = vec_ref[...]                   # (20, 8) -- tiny, load once

    w1 = vec[:, 0:1]                     # (20, 1)
    b1 = vec[:, 1:2]
    b2 = vec[:, 2:3]
    b3 = vec[:, 3:4]
    b4 = vec[:, 4:5]
    w5 = vec[:, 5:6]
    b5 = vec[0:1, 6:7]                   # (1, 1)

    # Layer 1 (in=1): outer product on the VPU; a K=1 matmul would waste the MXU.
    h = jnp.tanh(w1 * x + b1)            # (20, TN)

    # Layers 2-4: 20x20 matmuls on the MXU, batch streaming down the lane axis.
    h = jnp.tanh(jnp.dot(wh_ref[0], h, preferred_element_type=jnp.float32) + b2)
    h = jnp.tanh(jnp.dot(wh_ref[1], h, preferred_element_type=jnp.float32) + b3)
    h = jnp.tanh(jnp.dot(wh_ref[2], h, preferred_element_type=jnp.float32) + b4)

    # Layer 5 (out=1): VPU multiply + cross-sublane (XLU) reduce, not an M=1 matmul.
    out = jnp.sum(w5 * h, axis=0, keepdims=True) + b5   # (1, TN)

    o_ref[...] = out.astype(o_ref.dtype)


def pack_params(params):
    """params: list of (W, b) in torch layout, W (out, in), b (out,)."""
    (w1, b1), (w2, b2), (w3, b3), (w4, b4), (w5, b5) = params
    wh = jnp.stack([w2, w3, w4], axis=0)                 # (3, 20, 20)
    cols = [
        w1[:, 0],                                        # layer-1 weight column
        b1, b2, b3, b4,                                  # hidden biases
        w5[0, :],                                        # layer-5 weight row -> column
        jnp.full((FEAT,), b5[0], jnp.float32),           # output bias (broadcast)
        jnp.zeros((FEAT,), jnp.float32),                 # pad to 8 columns
    ]
    vec = jnp.stack(cols, axis=1)                        # (20, 8)
    return wh, vec


def net_forward(x, params, *, max_tn=MAX_TN):
    """x: (N, 1) float32 (same interface as the PyTorch module). Returns (N, 1)."""
    n = x.shape[0]
    n_lane = pl.cdiv(n, LANE_TILE) * LANE_TILE           # lane-aligned batch
    tn = min(max_tn, n_lane)                             # single tile when it fits
    n_pad = pl.cdiv(n_lane, tn) * tn
    grid = n_pad // tn

    xt = jnp.pad(x[:, 0], (0, n_pad - n)).reshape(1, n_pad)   # feature-major, padded
    wh, vec = pack_params(params)

    # Advisory cost hint for the XLA scheduler (3 matmuls + 2 vector layers, 4 tanh layers).
    flops = 2 * n_pad * (FEAT + 3 * FEAT * FEAT + FEAT)
    cost = pl.CostEstimate(
        flops=flops,
        transcendentals=4 * FEAT * n_pad,
        bytes_accessed=(xt.size + wh.size + vec.size + n_pad) * 4,
    )

    out = pl.pallas_call(
        _net_kernel,
        out_shape=jax.ShapeDtypeStruct((1, n_pad), jnp.float32),
        grid=(grid,),
        in_specs=[
            pl.BlockSpec((1, tn), lambda i: (0, i)),             # x tile (pipelined)
            pl.BlockSpec((3, FEAT, FEAT), lambda i: (0, 0, 0)),  # resident weights
            pl.BlockSpec((FEAT, 8), lambda i: (0, 0)),           # resident vectors
        ],
        out_specs=pl.BlockSpec((1, tn), lambda i: (0, i)),
        compiler_params=pltpu.CompilerParams(
            dimension_semantics=("parallel",)),
        cost_estimate=cost,
    )(xt, wh, vec)

    return out[0, :n].reshape(n, 1)


def init_params(key):
    """nn.Linear default init U(-1/sqrt(fan_in), +1/sqrt(fan_in)), torch layout."""
    dims = [(1, FEAT), (FEAT, FEAT), (FEAT, FEAT), (FEAT, FEAT), (FEAT, 1)]
    params = []
    for fan_in, fan_out in dims:
        key, kw, kb = jax.random.split(key, 3)
        bound = 1.0 / (fan_in ** 0.5)
        w = jax.random.uniform(kw, (fan_out, fan_in), jnp.float32, -bound, bound)
        b = jax.random.uniform(kb, (fan_out,), jnp.float32, -bound, bound)
        params.append((w, b))
    return params


def net_reference(x, params):
    h = x
    for i, (w, b) in enumerate(params):
        h = h @ w.T + b
        if i < len(params) - 1:
            h = jnp.tanh(h)
    return h


if __name__ == "__main__":
    key = jax.random.PRNGKey(0)
    kx, kp = jax.random.split(key)

    N = 1000                                # collocation-point batch (not lane-aligned)
    x = jax.random.uniform(kx, (N, 1), jnp.float32, -1.0, 1.0)
    params = init_params(kp)

    out = net_forward(x, params)
    out = jax.block_until_ready(out)

    ref = net_reference(x, params)
    assert out.shape == (N, 1)
    assert jnp.allclose(out, ref, atol=1e-5, rtol=1e-5), "mismatch vs reference"

    # Also exercise the multi-tile path (N > MAX_TN) to keep the grid loop covered.
    N2 = 5000
    x2 = jax.random.uniform(kx, (N2, 1), jnp.float32, -1.0, 1.0)
    out2 = jax.block_until_ready(net_forward(x2, params))
    ref2 = net_reference(x2, params)
    assert jnp.allclose(out2, ref2, atol=1e-5, rtol=1e-5), "mismatch vs reference (multi-tile)"

    # TODO(synk): for the full PINN residual, fuse tangent/derivative propagation
    # (d/dx, d2/dx2 of the network) into this same kernel instead of a separate jvp.

    print("KERNEL_OK")
</pallas_src>

<mosaic_0001>
module attributes {stable_mosaic.version = 11 : i64} {
  func.func @_net_kernel(%arg0: i32, %arg1: memref<1x1024xf32, #tpu.memory_space<vmem>>, %arg2: memref<3x20x20xf32, #tpu.memory_space<vmem>>, %arg3: memref<20x8xf32, #tpu.memory_space<vmem>>, %arg4: memref<1x1024xf32, #tpu.memory_space<vmem>>) attributes {dimension_semantics = [#tpu.dimension_semantics<parallel>], iteration_bounds = array<i64: 1>, scalar_prefetch = 0 : i64, scratch_operands = 0 : i64, tpu.core_type = #tpu.core_type<tc>, window_params = [{transform_indices = @transform_0, window_bounds = array<i64: 1, 1024>}, {pipeline_mode = #tpu.pipeline_mode<synchronous>, transform_indices = @transform_1, window_bounds = array<i64: 3, 20, 20>}, {pipeline_mode = #tpu.pipeline_mode<synchronous>, transform_indices = @transform_2, window_bounds = array<i64: 20, 8>}, {transform_indices = @transform_3, window_bounds = array<i64: 1, 1024>}]} {
    %c0 = arith.constant 0 : index
    %c0_0 = arith.constant 0 : index
    %0 = vector.load %arg1[%c0, %c0_0] : memref<1x1024xf32, #tpu.memory_space<vmem>>, vector<1x1024xf32>
    %c0_1 = arith.constant 0 : index
    %c0_2 = arith.constant 0 : index
    %1 = vector.load %arg3[%c0_1, %c0_2] : memref<20x8xf32, #tpu.memory_space<vmem>>, vector<20x8xf32>
    %2 = vector.extract_strided_slice %1 {offsets = [0, 0], sizes = [20, 1], strides = [1, 1]} : vector<20x8xf32> to vector<20x1xf32>
    %3 = vector.extract_strided_slice %1 {offsets = [0, 1], sizes = [20, 1], strides = [1, 1]} : vector<20x8xf32> to vector<20x1xf32>
    %4 = vector.extract_strided_slice %1 {offsets = [0, 2], sizes = [20, 1], strides = [1, 1]} : vector<20x8xf32> to vector<20x1xf32>
    %5 = vector.extract_strided_slice %1 {offsets = [0, 3], sizes = [20, 1], strides = [1, 1]} : vector<20x8xf32> to vector<20x1xf32>
    %6 = vector.extract_strided_slice %1 {offsets = [0, 4], sizes = [20, 1], strides = [1, 1]} : vector<20x8xf32> to vector<20x1xf32>
    %7 = vector.extract_strided_slice %1 {offsets = [0, 5], sizes = [20, 1], strides = [1, 1]} : vector<20x8xf32> to vector<20x1xf32>
    %8 = vector.extract_strided_slice %1 {offsets = [0, 6], sizes = [1, 1], strides = [1, 1]} : vector<20x8xf32> to vector<1x1xf32>
    %9 = vector.broadcast %2 : vector<20x1xf32> to vector<20x1024xf32>
    %10 = vector.broadcast %0 : vector<1x1024xf32> to vector<20x1024xf32>
    %11 = arith.mulf %9, %10 : vector<20x1024xf32>
    %12 = vector.broadcast %3 : vector<20x1xf32> to vector<20x1024xf32>
    %13 = arith.addf %11, %12 : vector<20x1024xf32>
    %14 = math.tanh %13 : vector<20x1024xf32>
    %c0_3 = arith.constant 0 : index
    %c0_4 = arith.constant 0 : index
    %c0_5 = arith.constant 0 : index
    %15 = vector.load %arg2[%c0_3, %c0_4, %c0_5] : memref<3x20x20xf32, #tpu.memory_space<vmem>>, vector<1x20x20xf32>
    %16 = vector.shape_cast %15 : vector<1x20x20xf32> to vector<20x20xf32>
    %cst = arith.constant dense<0.000000e+00> : vector<20x1024xf32>
    %17 = tpu.matmul %16, %14, %cst {dimension_numbers = #tpu.dot_dimension_numbers<[1], [0], [0], [1], [0, 0, 1, 1], [], []>} : vector<20x20xf32>, vector<20x1024xf32>, vector<20x1024xf32> -> vector<20x1024xf32>
    %18 = vector.broadcast %4 : vector<20x1xf32> to vector<20x1024xf32>
    %19 = arith.addf %17, %18 : vector<20x1024xf32>
    %20 = math.tanh %19 : vector<20x1024xf32>
    %c1 = arith.constant 1 : index
    %c0_6 = arith.constant 0 : index
    %c0_7 = arith.constant 0 : index
    %21 = vector.load %arg2[%c1, %c0_6, %c0_7] : memref<3x20x20xf32, #tpu.memory_space<vmem>>, vector<1x20x20xf32>
    %22 = vector.shape_cast %21 : vector<1x20x20xf32> to vector<20x20xf32>
    %cst_8 = arith.constant dense<0.000000e+00> : vector<20x1024xf32>
    %23 = tpu.matmul %22, %20, %cst_8 {dimension_numbers = #tpu.dot_dimension_numbers<[1], [0], [0], [1], [0, 0, 1, 1], [], []>} : vector<20x20xf32>, vector<20x1024xf32>, vector<20x1024xf32> -> vector<20x1024xf32>
    %24 = vector.broadcast %5 : vector<20x1xf32> to vector<20x1024xf32>
    %25 = arith.addf %23, %24 : vector<20x1024xf32>
    %26 = math.tanh %25 : vector<20x1024xf32>
    %c2 = arith.constant 2 : index
    %c0_9 = arith.constant 0 : index
    %c0_10 = arith.constant 0 : index
    %27 = vector.load %arg2[%c2, %c0_9, %c0_10] : memref<3x20x20xf32, #tpu.memory_space<vmem>>, vector<1x20x20xf32>
    %28 = vector.shape_cast %27 : vector<1x20x20xf32> to vector<20x20xf32>
    %cst_11 = arith.constant dense<0.000000e+00> : vector<20x1024xf32>
    %29 = tpu.matmul %28, %26, %cst_11 {dimension_numbers = #tpu.dot_dimension_numbers<[1], [0], [0], [1], [0, 0, 1, 1], [], []>} : vector<20x20xf32>, vector<20x1024xf32>, vector<20x1024xf32> -> vector<20x1024xf32>
    %30 = vector.broadcast %6 : vector<20x1xf32> to vector<20x1024xf32>
    %31 = arith.addf %29, %30 : vector<20x1024xf32>
    %32 = math.tanh %31 : vector<20x1024xf32>
    %33 = vector.broadcast %7 : vector<20x1xf32> to vector<20x1024xf32>
    %34 = arith.mulf %33, %32 : vector<20x1024xf32>
    %cst_12 = arith.constant dense<0.000000e+00> : vector<1024xf32>
    %35 = vector.multi_reduction <add>, %34, %cst_12 [0] : vector<20x1024xf32> to vector<1024xf32>
    %36 = vector.shape_cast %35 : vector<1024xf32> to vector<1x1024xf32>
    %37 = vector.broadcast %8 : vector<1x1xf32> to vector<1x1024xf32>
    %38 = arith.addf %36, %37 : vector<1x1024xf32>
    %c0_13 = arith.constant 0 : index
    %c0_14 = arith.constant 0 : index
    %39 = vector.load %arg4[%c0_13, %c0_14] : memref<1x1024xf32, #tpu.memory_space<vmem>>, vector<1x1024xf32>
    tpu.vector_store %arg4[%c0_13, %c0_14], %38 {strides = array<i32>} : memref<1x1024xf32, #tpu.memory_space<vmem>>, vector<1x1024xf32>,
    return
  }
  func.func @transform_0(%arg0: i32) -> (i32, i32) {
    %c0_i32 = arith.constant 0 : i32
    %c0_i32_0 = arith.constant 0 : i32
    return %c0_i32, %arg0 : i32, i32
  }
  func.func @transform_1(%arg0: i32) -> (i32, i32, i32) {
    %c0_i32 = arith.constant 0 : i32
    %c0_i32_0 = arith.constant 0 : i32
    %c0_i32_1 = arith.constant 0 : i32
    %c0_i32_2 = arith.constant 0 : i32
    return %c0_i32, %c0_i32_0, %c0_i32_1 : i32, i32, i32
  }
  func.func @transform_2(%arg0: i32) -> (i32, i32) {
    %c0_i32 = arith.constant 0 : i32
    %c0_i32_0 = arith.constant 0 : i32
    %c0_i32_1 = arith.constant 0 : i32
    return %c0_i32, %c0_i32_0 : i32, i32
  }
  func.func @transform_3(%arg0: i32) -> (i32, i32) {
    %c0_i32 = arith.constant 0 : i32
    %c0_i32_0 = arith.constant 0 : i32
    return %c0_i32, %arg0 : i32, i32
  }
}

</mosaic_0001>

<llo_original>
// kernel: tpu_custom_call.1
$region0: #{tpu_custom_call.1}
  #allocation0 [shape = 'u32[]', space=smem, size = 0x4, offset = 0x4, fixed_abs, tag = 'smem constant byte address 0x4 - core index']
  #allocation1 [shape = 'u32[144,128]{1,0:T(1,128)}', space=vmem, size = 0x12000, scoped, tag = 'internal scratch']
  %s0 = inlined_call_operand.vmem [shape: f32[1,1024], index: 0, kind: input, shape index: {}]
  %s1 = inlined_call_operand.hbm [shape: f32[3,20,20], index: 1, kind: input, shape index: {}]
  %s2 = inlined_call_operand.vmem [shape: f32[20,8], index: 2, kind: input, shape index: {}]
  %s3 = inlined_call_operand.hbm [shape: f32[1,1024], index: 3, kind: output, shape index: {}]
  %s4 = sld [smem:[#allocation0]]
  $region26: #{tpu_custom_call.1} parent=0
    _
  %s6 = ssub.s32 1, %s4
  %s7 = scalar_select 0, %s6, %s4
  $region1: #{tpu_custom_call.1} parent=0
    #allocation2 [shape = 'u8[36864]{0}', space=vmem, size = 0x9000, scoped, tag = 'input window, operand 1, single buffered']
    #allocation3 [shape = 's32[1]{0}', space=sflag, size = 0x4, scoped, tag = 'scoped memory for tpu_custom_call.1']
    #allocation4 [shape = 's32[1]{0}', space=sflag, size = 0x4, scoped, tag = 'scoped memory for tpu_custom_call.1']
    #allocation5 [shape = 'u8[4096]{0}', space=vmem, size = 0x1000, scoped, tag = 'output window, operand 0, single buffered']
    %8 = vsyncpa [#allocation3], 0
    %9 = vsyncpa [#allocation4], 0
    // Predicated region
    $region2: #{tpu_custom_call.1} parent=1 // pred_check
      _
    $region3: #{tpu_custom_call.1} parent=1 // pred_check_branch
      %11 = sbr.rel (0) target = $region5
    $region4: #{tpu_custom_call.1} parent=1 // pred_region
      _
    $region5: #{tpu_custom_call.1} parent=1 // pred_fallthru
      _
    // Predicated region
    $region6: #{tpu_custom_call.1} parent=1 // pred_check
      _
    $region7: #{tpu_custom_call.1} parent=1 // pred_check_branch
      %13 = sbr.rel (0) target = $region9
    $region8: #{tpu_custom_call.1} parent=1 // pred_region
      %s15 = ssub.s32 1152, 1152
      %16 = vsyncadd [#allocation3], %s15
      %s17 = sshll.u32 [#allocation2], 4
      %s18 = int_to_ptr.vmem [resolvable:$true] %s17
      %23 = dma.hbm_to_vmem [thread:$0]  %s1, 1152, %s18, [#allocation3], 128, 128, 8
    $region9: #{tpu_custom_call.1} parent=1 // pred_fallthru
      _
    // Predicated region
    $region10: #{tpu_custom_call.1} parent=1 // pred_check
      _
    $region11: #{tpu_custom_call.1} parent=1 // pred_check_branch
      %25 = sbr.rel (0) target = $region13
    $region12: #{tpu_custom_call.1} parent=1 // pred_region
      _
    $region13: #{tpu_custom_call.1} parent=1 // pred_fallthru
      _
    // Predicated region
    $region14: #{tpu_custom_call.1} parent=1 // pred_check
      _
    $region15: #{tpu_custom_call.1} parent=1 // pred_check_branch
      %27 = sbr.rel (0) target = $region17
    $region16: #{tpu_custom_call.1} parent=1 // pred_region
      %28 = dma.done [#allocation3], 1152
    $region17: #{tpu_custom_call.1} parent=1 // pred_fallthru
      _
    %v29 = vld [vmem:[%s0] sm:$0xff]
    %v30 = vld [vmem:[%s2] sm:$0xff]
    %v31 = vld [vmem:[%s2 + $0x8] sm:$0xff]
    %v32 = vld [vmem:[%s2 + $0x10] sm:$0xf]
    %34 = vset.pattern.permute.xlu0 0
    %35 = vperm.xlu0 %34, %v30
    %v36 = vpop.permute.xlu0 %35
    %39 = vset.pattern.permute.xlu0 0
    %40 = vperm.xlu0 %39, %v31
    %v41 = vpop.permute.xlu0 %40
    %44 = vset.pattern.permute.xlu0 0
    %45 = vperm.xlu0 %44, %v32
    %v46 = vpop.permute.xlu0 %45
    %v49 = vlaneseq
    %v50 = vshrl.u32 %v49, 7
    %v51 = vsub.s32 0, %v50
    %v52 = vrot.slane %v29, %v51
    %v53 = vlaneseq
    %v54 = vshrl.u32 %v53, 7
    %v55 = vsub.s32 1, %v54
    %v56 = vrot.slane %v29, %v55
    %v57 = vlaneseq
    %v58 = vshrl.u32 %v57, 7
    %v59 = vsub.s32 2, %v58
    %v60 = vrot.slane %v29, %v59
    %v61 = vlaneseq
    %v62 = vshrl.u32 %v61, 7
    %v63 = vsub.s32 3, %v62
    %v64 = vrot.slane %v29, %v63
    %v65 = vlaneseq
    %v66 = vshrl.u32 %v65, 7
    %v67 = vsub.s32 4, %v66
    %v68 = vrot.slane %v29, %v67
    %v69 = vlaneseq
    %v70 = vshrl.u32 %v69, 7
    %v71 = vsub.s32 5, %v70
    %v72 = vrot.slane %v29, %v71
    %v73 = vlaneseq
    %v74 = vshrl.u32 %v73, 7
    %v75 = vsub.s32 6, %v74
    %v76 = vrot.slane %v29, %v75
    %v77 = vlaneseq
    %v78 = vshrl.u32 %v77, 7
    %v79 = vsub.s32 7, %v78
    %v80 = vrot.slane %v29, %v79
    %v89 = vmul.f32 %v36, %v52
    %v90 = vmul.f32 %v36, %v56
    %v91 = vmul.f32 %v36, %v60
    %v92 = vmul.f32 %v36, %v64
    %v93 = vmul.f32 %v36, %v68
    %v94 = vmul.f32 %v36, %v72
    %v95 = vmul.f32 %v36, %v76
    %v96 = vmul.f32 %v36, %v80
    %v97 = vmul.f32 %v41, %v52
    %v98 = vmul.f32 %v41, %v56
    %v99 = vmul.f32 %v41, %v60
    %v100 = vmul.f32 %v41, %v64
    %v101 = vmul.f32 %v41, %v68
    %v102 = vmul.f32 %v41, %v72
    %v103 = vmul.f32 %v41, %v76
    %v104 = vmul.f32 %v41, %v80
    %v105 = vmul.f32 %v46, %v52
    %v106 = vmul.f32 %v46, %v56
    %v107 = vmul.f32 %v46, %v60
    %v108 = vmul.f32 %v46, %v64
    %v109 = vmul.f32 %v46, %v68
    %v110 = vmul.f32 %v46, %v72
    %v111 = vmul.f32 %v46, %v76
    %v112 = vmul.f32 %v46, %v80
    %113 = vset.pattern.permute.xlu0 1
    %114 = vperm.xlu0 %113, %v30
    %v115 = vpop.permute.xlu0 %114
    %117 = vset.pattern.permute.xlu0 1
    %118 = vperm.xlu0 %117, %v31
    %v119 = vpop.permute.xlu0 %118
    %121 = vset.pattern.permute.xlu0 1
    %122 = vperm.xlu0 %121, %v32
    %v123 = vpop.permute.xlu0 %122
    %v125 = vadd.f32 %v89, %v115
    %v126 = vadd.f32 %v90, %v115
    %v127 = vadd.f32 %v91, %v115
    %v128 = vadd.f32 %v92, %v115
    %v129 = vadd.f32 %v93, %v115
    %v130 = vadd.f32 %v94, %v115
    %v131 = vadd.f32 %v95, %v115
    %v132 = vadd.f32 %v96, %v115
    %v133 = vadd.f32 %v97, %v119
    %v134 = vadd.f32 %v98, %v119
    %v135 = vadd.f32 %v99, %v119
    %v136 = vadd.f32 %v100, %v119
    %v137 = vadd.f32 %v101, %v119
    %v138 = vadd.f32 %v102, %v119
    %v139 = vadd.f32 %v103, %v119
    %v140 = vadd.f32 %v104, %v119
    %v141 = vadd.f32 %v105, %v123
    %v142 = vadd.f32 %v106, %v123
    %v143 = vadd.f32 %v107, %v123
    %v144 = vadd.f32 %v108, %v123
    %v145 = vadd.f32 %v109, %v123
    %v146 = vadd.f32 %v110, %v123
    %v147 = vadd.f32 %v111, %v123
    %v148 = vadd.f32 %v112, %v123
    %v149 = vtanh.pop %v125
    %v150 = vtanh.pop %v126
    %v151 = vtanh.pop %v127
    %v152 = vtanh.pop %v128
    %v153 = vtanh.pop %v129
    %v154 = vtanh.pop %v130
    %v155 = vtanh.pop %v131
    %v156 = vtanh.pop %v132
    %v157 = vtanh.pop %v133
    %v158 = vtanh.pop %v134
    %v159 = vtanh.pop %v135
    %v160 = vtanh.pop %v136
    %v161 = vtanh.pop %v137
    %v162 = vtanh.pop %v138
    %v163 = vtanh.pop %v139
    %v164 = vtanh.pop %v140
    %v165 = vtanh.pop %v141
    %v166 = vtanh.pop %v142
    %v167 = vtanh.pop %v143
    %v168 = vtanh.pop %v144
    %v169 = vtanh.pop %v145
    %v170 = vtanh.pop %v146
    %v171 = vtanh.pop %v147
    %v172 = vtanh.pop %v148
    %v173 = vld [vmem:[#allocation2] sm:$0xff]
    %v174 = vld [vmem:[#allocation2 + $0x8] sm:$0xff]
    %v175 = vld [vmem:[#allocation2 + $0x10] sm:$0xf]
    %176 = vset.pattern.permute.xlu0 2
    %177 = vperm.xlu0 %176, %v30
    %v178 = vpop.permute.xlu0 %177
    %180 = vset.pattern.permute.xlu0 2
    %181 = vperm.xlu0 %180, %v31
    %v182 = vpop.permute.xlu0 %181
    %184 = vset.pattern.permute.xlu0 2
    %185 = vperm.xlu0 %184, %v32
    %v186 = vpop.permute.xlu0 %185
    %vm188 = vcmask 162816
    %v190 = vsel %vm188, %v173, 0
    %v193 = vsel %vm188, %v174, 0
    %v196 = vsel %vm188, %v175, 0
    %vm198 = vcmask 1043456
    %v200 = vsel %vm198, %v165, 0
    %v203 = vsel %vm198, %v166, 0
    %v206 = vsel %vm198, %v167, 0
    %v209 = vsel %vm198, %v168, 0
    %v212 = vsel %vm198, %v169, 0
    %v215 = vsel %vm198, %v170, 0
    %v218 = vsel %vm198, %v171, 0
    %v221 = vsel %vm198, %v172, 0
    %223 = vmatprep.subr.mxu0 %v150
    %224 = vmatpush1.msra.mxu0 %v149
    %225 = vmatprep.subr.mxu0 %v158
    %226 = vmatpush1.msra.mxu0 %v157
    %227 = vmatprep.subr.mxu0 %v203
    %228 = vmatpush1.msra.mxu0 %v200
    %229 = vmatprep.subr.mxu0 0.0
    %230 = vmatpush1.msra.mxu0 0.0
    %231 = vmatprep.subr.mxu0 0.0
    %232 = vmatpush1.msra.mxu0 0.0
    %233 = vmatprep.subr.mxu0 0.0
    %234 = vmatpush1.msra.mxu0 0.0
    %235 = vmatprep.subr.mxu0 0.0
    %236 = vmatpush1.msra.mxu0 0.0
    %237 = vmatprep.subr.mxu0 0.0
    %238 = vmatpush1.msra.mxu0 0.0
    %239 = vmatprep.subr.mxu0 0.0
    %240 = vmatpush1.msra.mxu0 0.0
    %241 = vmatprep.subr.mxu0 0.0
    %242 = vmatpush1.msra.mxu0 0.0
    %243 = vmatprep.subr.mxu0 0.0
    %244 = vmatpush1.msra.mxu0 0.0
    %245 = vmatprep.subr.mxu0 0.0
    %246 = vmatpush1.msra.mxu0 0.0
    %247 = vmatprep.subr.mxu0 0.0
    %248 = vmatpush1.msra.mxu0 0.0
    %249 = vmatprep.subr.mxu0 0.0
    %250 = vmatpush1.msra.mxu0 0.0
    %251 = vmatprep.subr.mxu0 0.0
    %252 = vmatpush1.msra.mxu0 0.0
    %253 = vmatprep.subr.mxu0 0.0
    %254 = vmatpush1.msra.mxu0 0.0
    %255 = vmatprep.subr.mxu0 0.0
    %256 = vmatpush1.msra.mxu0 0.0
    %257 = vmatprep.subr.mxu0 0.0
    %258 = vmatpush1.msra.mxu0 0.0
    %259 = vmatprep.subr.mxu0 0.0
    %260 = vmatpush1.msra.mxu0 0.0
    %261 = vmatprep.subr.mxu0 0.0
    %262 = vmatpush1.msra.mxu0 0.0
    %263 = vmatprep.subr.mxu0 0.0
    %264 = vmatpush1.msra.mxu0 0.0
    %265 = vmatprep.subr.mxu0 0.0
    %266 = vmatpush1.msra.mxu0 0.0
    %267 = vmatprep.subr.mxu0 0.0
    %268 = vmatpush1.msra.mxu0 0.0
    %269 = vmatprep.subr.mxu0 0.0
    %270 = vmatpush1.msra.mxu0 0.0
    %271 = vmatprep.subr.mxu0 0.0
    %272 = vmatpush1.msra.mxu0 0.0
    %273 = vmatprep.subr.mxu0 0.0
    %274 = vmatpush1.msra.mxu0 0.0
    %275 = vmatprep.subr.mxu0 0.0
    %276 = vmatpush1.msra.mxu0 0.0
    %277 = vmatprep.subr.mxu0 0.0
    %278 = vmatpush1.msra.mxu0 0.0
    %279 = vmatprep.subr.mxu0 0.0
    %280 = vmatpush1.msra.mxu0 0.0
    %281 = vmatprep.subr.mxu0 0.0
    %282 = vmatpush1.msra.mxu0 0.0
    %283 = vmatprep.subr.mxu0 0.0
    %284 = vmatpush1.msra.mxu0 0.0
    %285 = vmatprep.subr.mxu0 0.0
    %286 = vmatpush1.msra.mxu0 0.0
    %287 = vmatprep.mubr.f32.mxu0 0.0
    %288 = vmatmul.mubr.f32.gmra.mrb[0].mxu0 %v190
    %v289 = vpop.f32.mrb[0].mxu0
    %v290 = vadd.f32 %v178, %v289
    %v291 = vpop.f32.mrb[0].mxu0
    %v292 = vadd.f32 %v178, %v291
    %293 = vmatprep.mubr.f32.mxu0 0.0
    %294 = vmatmul.mubr.f32.gmra.mrb[0].mxu0 %v193
    %v295 = vpop.f32.mrb[0].mxu0
    %v296 = vadd.f32 %v182, %v295
    %v297 = vpop.f32.mrb[0].mxu0
    %v298 = vadd.f32 %v182, %v297
    %299 = vmatprep.mubr.f32.mxu0 0.0
    %300 = vmatmul.mubr.f32.gmra.mrb[0].mxu0 %v196
    %v301 = vpop.f32.mrb[0].mxu0
    %v302 = vadd.f32 %v186, %v301
    %v303 = vpop.f32.mrb[0].mxu0
    %v304 = vadd.f32 %v186, %v303
    %305 = vdwg.mxu0
    %306 = vmatprep.subr.mxu0 %v152
    %307 = vmatpush1.msra.mxu0 %v151
    %308 = vmatprep.subr.mxu0 %v160
    %309 = vmatpush1.msra.mxu0 %v159
    %310 = vmatprep.subr.mxu0 %v209
    %311 = vmatpush1.msra.mxu0 %v206
    %312 = vmatprep.subr.mxu0 0.0
    %313 = vmatpush1.msra.mxu0 0.0
    %314 = vmatprep.subr.mxu0 0.0
    %315 = vmatpush1.msra.mxu0 0.0
    %316 = vmatprep.subr.mxu0 0.0
    %317 = vmatpush1.msra.mxu0 0.0
    %318 = vmatprep.subr.mxu0 0.0
    %319 = vmatpush1.msra.mxu0 0.0
    %320 = vmatprep.subr.mxu0 0.0
    %321 = vmatpush1.msra.mxu0 0.0
    %322 = vmatprep.subr.mxu0 0.0
    %323 = vmatpush1.msra.mxu0 0.0
    %324 = vmatprep.subr.mxu0 0.0
    %325 = vmatpush1.msra.mxu0 0.0
    %326 = vmatprep.subr.mxu0 0.0
    %327 = vmatpush1.msra.mxu0 0.0
    %328 = vmatprep.subr.mxu0 0.0
    %329 = vmatpush1.msra.mxu0 0.0
    %330 = vmatprep.subr.mxu0 0.0
    %331 = vmatpush1.msra.mxu0 0.0
    %332 = vmatprep.subr.mxu0 0.0
    %333 = vmatpush1.msra.mxu0 0.0
    %334 = vmatprep.subr.mxu0 0.0
    %335 = vmatpush1.msra.mxu0 0.0
    %336 = vmatprep.subr.mxu0 0.0
    %337 = vmatpush1.msra.mxu0 0.0
    %338 = vmatprep.subr.mxu0 0.0
    %339 = vmatpush1.msra.mxu0 0.0
    %340 = vmatprep.subr.mxu0 0.0
    %341 = vmatpush1.msra.mxu0 0.0
    %342 = vmatprep.subr.mxu0 0.0
    %343 = vmatpush1.msra.mxu0 0.0
    %344 = vmatprep.subr.mxu0 0.0
    %345 = vmatpush1.msra.mxu0 0.0
    %346 = vmatprep.subr.mxu0 0.0
    %347 = vmatpush1.msra.mxu0 0.0
    %348 = vmatprep.subr.mxu0 0.0
    %349 = vmatpush1.msra.mxu0 0.0
    %350 = vmatprep.subr.mxu0 0.0
    %351 = vmatpush1.msra.mxu0 0.0
    %352 = vmatprep.subr.mxu0 0.0
    %353 = vmatpush1.msra.mxu0 0.0
    %354 = vmatprep.subr.mxu0 0.0
    %355 = vmatpush1.msra.mxu0 0.0
    %356 = vmatprep.subr.mxu0 0.0
    %357 = vmatpush1.msra.mxu0 0.0
    %358 = vmatprep.subr.mxu0 0.0
    %359 = vmatpush1.msra.mxu0 0.0
    %360 = vmatprep.subr.mxu0 0.0
    %361 = vmatpush1.msra.mxu0 0.0
    %362 = vmatprep.subr.mxu0 0.0
    %363 = vmatpush1.msra.mxu0 0.0
    %364 = vmatprep.subr.mxu0 0.0
    %365 = vmatpush1.msra.mxu0 0.0
    %366 = vmatprep.subr.mxu0 0.0
    %367 = vmatpush1.msra.mxu0 0.0
    %368 = vmatprep.subr.mxu0 0.0
    %369 = vmatpush1.msra.mxu0 0.0
    %370 = vmatprep.mubr.f32.mxu0 0.0
    %371 = vmatmul.mubr.f32.gmra.mrb[0].mxu0 %v190
    %v372 = vpop.f32.mrb[0].mxu0
    %v373 = vadd.f32 %v178, %v372
    %v374 = vpop.f32.mrb[0].mxu0
    %v375 = vadd.f32 %v178, %v374
    %376 = vmatprep.mubr.f32.mxu0 0.0
    %377 = vmatmul.mubr.f32.gmra.mrb[0].mxu0 %v193
    %v378 = vpop.f32.mrb[0].mxu0
    %v379 = vadd.f32 %v182, %v378
    %v380 = vpop.f32.mrb[0].mxu0
    %v381 = vadd.f32 %v182, %v380
    %382 = vmatprep.mubr.f32.mxu0 0.0
    %383 = vmatmul.mubr.f32.gmra.mrb[0].mxu0 %v196
    %v384 = vpop.f32.mrb[0].mxu0
    %v385 = vadd.f32 %v186, %v384
    %v386 = vpop.f32.mrb[0].mxu0
    %v387 = vadd.f32 %v186, %v386
    %388 = vdwg.mxu0
    %389 = vmatprep.subr.mxu0 %v154
    %390 = vmatpush1.msra.mxu0 %v153
    %391 = vmatprep.subr.mxu0 %v162
    %392 = vmatpush1.msra.mxu0 %v161
    %393 = vmatprep.subr.mxu0 %v215
    %394 = vmatpush1.msra.mxu0 %v212
    %395 = vmatprep.subr.mxu0 0.0
    %396 = vmatpush1.msra.mxu0 0.0
    %397 = vmatprep.subr.mxu0 0.0
    %398 = vmatpush1.msra.mxu0 0.0
    %399 = vmatprep.subr.mxu0 0.0
    %400 = vmatpush1.msra.mxu0 0.0
    %401 = vmatprep.subr.mxu0 0.0
    %402 = vmatpush1.msra.mxu0 0.0
    %403 = vmatprep.subr.mxu0 0.0
    %404 = vmatpush1.msra.mxu0 0.0
    %405 = vmatprep.subr.mxu0 0.0
    %406 = vmatpush1.msra.mxu0 0.0
    %407 = vmatprep.subr.mxu0 0.0
    %408 = vmatpush1.msra.mxu0 0.0
    %409 = vmatprep.subr.mxu0 0.0
    %410 = vmatpush1.msra.mxu0 0.0
    %411 = vmatprep.subr.mxu0 0.0
    %412 = vmatpush1.msra.mxu0 0.0
    %413 = vmatprep.subr.mxu0 0.0
    %414 = vmatpush1.msra.mxu0 0.0
    %415 = vmatprep.subr.mxu0 0.0
    %416 = vmatpush1.msra.mxu0 0.0
    %417 = vmatprep.subr.mxu0 0.0
    %418 = vmatpush1.msra.mxu0 0.0
    %419 = vmatprep.subr.mxu0 0.0
    %420 = vmatpush1.msra.mxu0 0.0
    %421 = vmatprep.subr.mxu0 0.0
    %422 = vmatpush1.msra.mxu0 0.0
    %423 = vmatprep.subr.mxu0 0.0
    %424 = vmatpush1.msra.mxu0 0.0
    %425 = vmatprep.subr.mxu0 0.0
    %426 = vmatpush1.msra.mxu0 0.0
    %427 = vmatprep.subr.mxu0 0.0
    %428 = vmatpush1.msra.mxu0 0.0
    %429 = vmatprep.subr.mxu0 0.0
    %430 = vmatpush1.msra.mxu0 0.0
    %431 = vmatprep.subr.mxu0 0.0
    %432 = vmatpush1.msra.mxu0 0.0
    %433 = vmatprep.subr.mxu0 0.0
    %434 = vmatpush1.msra.mxu0 0.0
    %435 = vmatprep.subr.mxu0 0.0
    %436 = vmatpush1.msra.mxu0 0.0
    %437 = vmatprep.subr.mxu0 0.0
    %438 = vmatpush1.msra.mxu0 0.0
    %439 = vmatprep.subr.mxu0 0.0
    %440 = vmatpush1.msra.mxu0 0.0
    %441 = vmatprep.subr.mxu0 0.0
    %442 = vmatpush1.msra.mxu0 0.0
    %443 = vmatprep.subr.mxu0 0.0
    %444 = vmatpush1.msra.mxu0 0.0
    %445 = vmatprep.subr.mxu0 0.0
    %446 = vmatpush1.msra.mxu0 0.0
    %447 = vmatprep.subr.mxu0 0.0
    %448 = vmatpush1.msra.mxu0 0.0
    %449 = vmatprep.subr.mxu0 0.0
    %450 = vmatpush1.msra.mxu0 0.0
    %451 = vmatprep.subr.mxu0 0.0
    %452 = vmatpush1.msra.mxu0 0.0
    %453 = vmatprep.mubr.f32.mxu0 0.0
    %454 = vmatmul.mubr.f32.gmra.mrb[0].mxu0 %v190
    %v455 = vpop.f32.mrb[0].mxu0
    %v456 = vadd.f32 %v178, %v455
    %v457 = vpop.f32.mrb[0].mxu0
    %v458 = vadd.f32 %v178, %v457
    %459 = vmatprep.mubr.f32.mxu0 0.0
    %460 = vmatmul.mubr.f32.gmra.mrb[0].mxu0 %v193
    %v461 = vpop.f32.mrb[0].mxu0
    %v462 = vadd.f32 %v182, %v461
    %v463 = vpop.f32.mrb[0].mxu0
    %v464 = vadd.f32 %v182, %v463
    %465 = vmatprep.mubr.f32.mxu0 0.0
    %466 = vmatmul.mubr.f32.gmra.mrb[0].mxu0 %v196
    %v467 = vpop.f32.mrb[0].mxu0
    %v468 = vadd.f32 %v186, %v467
    %v469 = vpop.f32.mrb[0].mxu0
    %v470 = vadd.f32 %v186, %v469
    %471 = vdwg.mxu0
    %472 = vmatprep.subr.mxu0 %v156
    %473 = vmatpush1.msra.mxu0 %v155
    %474 = vmatprep.subr.mxu0 %v164
    %475 = vmatpush1.msra.mxu0 %v163
    %476 = vmatprep.subr.mxu0 %v221
    %477 = vmatpush1.msra.mxu0 %v218
    %478 = vmatprep.subr.mxu0 0.0
    %479 = vmatpush1.msra.mxu0 0.0
    %480 = vmatprep.subr.mxu0 0.0
    %481 = vmatpush1.msra.mxu0 0.0
    %482 = vmatprep.subr.mxu0 0.0
    %483 = vmatpush1.msra.mxu0 0.0
    %484 = vmatprep.subr.mxu0 0.0
    %485 = vmatpush1.msra.mxu0 0.0
    %486 = vmatprep.subr.mxu0 0.0
    %487 = vmatpush1.msra.mxu0 0.0
    %488 = vmatprep.subr.mxu0 0.0
    %489 = vmatpush1.msra.mxu0 0.0
    %490 = vmatprep.subr.mxu0 0.0
    %491 = vmatpush1.msra.mxu0 0.0
    %492 = vmatprep.subr.mxu0 0.0
    %493 = vmatpush1.msra.mxu0 0.0
    %494 = vmatprep.subr.mxu0 0.0
    %495 = vmatpush1.msra.mxu0 0.0
    %496 = vmatprep.subr.mxu0 0.0
    %497 = vmatpush1.msra.mxu0 0.0
    %498 = vmatprep.subr.mxu0 0.0
    %499 = vmatpush1.msra.mxu0 0.0
    %500 = vmatprep.subr.mxu0 0.0
    %501 = vmatpush1.msra.mxu0 0.0
    %502 = vmatprep.subr.mxu0 0.0
    %503 = vmatpush1.msra.mxu0 0.0
    %504 = vmatprep.subr.mxu0 0.0
    %505 = vmatpush1.msra.mxu0 0.0
    %506 = vmatprep.subr.mxu0 0.0
    %507 = vmatpush1.msra.mxu0 0.0
    %508 = vmatprep.subr.mxu0 0.0
    %509 = vmatpush1.msra.mxu0 0.0
    %510 = vmatprep.subr.mxu0 0.0
    %511 = vmatpush1.msra.mxu0 0.0
    %512 = vmatprep.subr.mxu0 0.0
    %513 = vmatpush1.msra.mxu0 0.0
    %514 = vmatprep.subr.mxu0 0.0
    %515 = vmatpush1.msra.mxu0 0.0
    %516 = vmatprep.subr.mxu0 0.0
    %517 = vmatpush1.msra.mxu0 0.0
    %518 = vmatprep.subr.mxu0 0.0
    %519 = vmatpush1.msra.mxu0 0.0
    %520 = vmatprep.subr.mxu0 0.0
    %521 = vmatpush1.msra.mxu0 0.0
    %522 = vmatprep.subr.mxu0 0.0
    %523 = vmatpush1.msra.mxu0 0.0
    %524 = vmatprep.subr.mxu0 0.0
    %525 = vmatpush1.msra.mxu0 0.0
    %526 = vmatprep.subr.mxu0 0.0
    %527 = vmatpush1.msra.mxu0 0.0
    %528 = vmatprep.subr.mxu0 0.0
    %529 = vmatpush1.msra.mxu0 0.0
    %530 = vmatprep.subr.mxu0 0.0
    %531 = vmatpush1.msra.mxu0 0.0
    %532 = vmatprep.subr.mxu0 0.0
    %533 = vmatpush1.msra.mxu0 0.0
    %534 = vmatprep.subr.mxu0 0.0
    %535 = vmatpush1.msra.mxu0 0.0
    %536 = vmatprep.mubr.f32.mxu0 0.0
    %537 = vmatmul.mubr.f32.gmra.mrb[0].mxu0 %v190
    %v538 = vpop.f32.mrb[0].mxu0
    %v539 = vadd.f32 %v178, %v538
    %v540 = vpop.f32.mrb[0].mxu0
    %v541 = vadd.f32 %v178, %v540
    %542 = vmatprep.mubr.f32.mxu0 0.0
    %543 = vmatmul.mubr.f32.gmra.mrb[0].mxu0 %v193
    %v544 = vpop.f32.mrb[0].mxu0
    %v545 = vadd.f32 %v182, %v544
    %v546 = vpop.f32.mrb[0].mxu0
    %v547 = vadd.f32 %v182, %v546
    %548 = vmatprep.mubr.f32.mxu0 0.0
    %549 = vmatmul.mubr.f32.gmra.mrb[0].mxu0 %v196
    %v550 = vpop.f32.mrb[0].mxu0
    %v551 = vadd.f32 %v186, %v550
    %v552 = vpop.f32.mrb[0].mxu0
    %v553 = vadd.f32 %v186, %v552
    %554 = vdwg.mxu0
    %v555 = vtanh.pop %v290
    %v556 = vtanh.pop %v292
    %v557 = vtanh.pop %v373
    %v558 = vtanh.pop %v375
    %v559 = vtanh.pop %v456
    %v560 = vtanh.pop %v458
    %v561 = vtanh.pop %v539
    %v562 = vtanh.pop %v541
    %v563 = vtanh.pop %v296
    %v564 = vtanh.pop %v298
    %v565 = vtanh.pop %v379
    %v566 = vtanh.pop %v381
    %v567 = vtanh.pop %v462
    %v568 = vtanh.pop %v464
    %v569 = vtanh.pop %v545
    %v570 = vtanh.pop %v547
    %v571 = vtanh.pop %v302
    %v572 = vtanh.pop %v304
    %v573 = vtanh.pop %v385
    %v574 = vtanh.pop %v387
    %v575 = vtanh.pop %v468
    %v576 = vtanh.pop %v470
    %v577 = vtanh.pop %v551
    %v578 = vtanh.pop %v553
    %s579 = scalar_lea.vmem [#allocation2], 24
    %v580 = vld [vmem:[%s579] sm:$0xff]
    %v581 = vld [vmem:[%s579 + $0x8] sm:$0xff]
    %v582 = vld [vmem:[%s579 + $0x10] sm:$0xf]
    %583 = vset.pattern.permute.xlu0 3
    %584 = vperm.xlu0 %583, %v30
    %v585 = vpop.permute.xlu0 %584
    %587 = vset.pattern.permute.xlu0 3
    %588 = vperm.xlu0 %587, %v31
    %v589 = vpop.permute.xlu0 %588
    %591 = vset.pattern.permute.xlu0 3
    %592 = vperm.xlu0 %591, %v32
    %v593 = vpop.permute.xlu0 %592
    %v596 = vsel %vm188, %v580, 0
    %v599 = vsel %vm188, %v581, 0
    %v602 = vsel %vm188, %v582, 0
    %v605 = vsel %vm198, %v571, 0
    %v608 = vsel %vm198, %v572, 0
    %v611 = vsel %vm198, %v573, 0
    %v614 = vsel %vm198, %v574, 0
    %v617 = vsel %vm198, %v575, 0
    %v620 = vsel %vm198, %v576, 0
    %v623 = vsel %vm198, %v577, 0
    %v626 = vsel %vm198, %v578, 0
    %628 = vmatprep.subr.mxu0 %v556
    %629 = vmatpush1.msra.mxu0 %v555
    %630 = vmatprep.subr.mxu0 %v564
    %631 = vmatpush1.msra.mxu0 %v563
    %632 = vmatprep.subr.mxu0 %v608
    %633 = vmatpush1.msra.mxu0 %v605
    %634 = vmatprep.subr.mxu0 0.0
    %635 = vmatpush1.msra.mxu0 0.0
    %636 = vmatprep.subr.mxu0 0.0
    %637 = vmatpush1.msra.mxu0 0.0
    %638 = vmatprep.subr.mxu0 0.0
    %639 = vmatpush1.msra.mxu0 0.0
    %640 = vmatprep.subr.mxu0 0.0
    %641 = vmatpush1.msra.mxu0 0.0
    %642 = vmatprep.subr.mxu0 0.0
    %643 = vmatpush1.msra.mxu0 0.0
    %644 = vmatprep.subr.mxu0 0.0
    %645 = vmatpush1.msra.mxu0 0.0
    %646 = vmatprep.subr.mxu0 0.0
    %647 = vmatpush1.msra.mxu0 0.0
    %648 = vmatprep.subr.mxu0 0.0
    %649 = vmatpush1.msra.mxu0 0.0
    %650 = vmatprep.subr.mxu0 0.0
    %651 = vmatpush1.msra.mxu0 0.0
    %652 = vmatprep.subr.mxu0 0.0
    %653 = vmatpush1.msra.mxu0 0.0
    %654 = vmatprep.subr.mxu0 0.0
    %655 = vmatpush1.msra.mxu0 0.0
    %656 = vmatprep.subr.mxu0 0.0
    %657 = vmatpush1.msra.mxu0 0.0
    %658 = vmatprep.subr.mxu0 0.0
    %659 = vmatpush1.msra.mxu0 0.0
    %660 = vmatprep.subr.mxu0 0.0
    %661 = vmatpush1.msra.mxu0 0.0
    %662 = vmatprep.subr.mxu0 0.0
    %663 = vmatpush1.msra.mxu0 0.0
    %664 = vmatprep.subr.mxu0 0.0
    %665 = vmatpush1.msra.mxu0 0.0
    %666 = vmatprep.subr.mxu0 0.0
    %667 = vmatpush1.msra.mxu0 0.0
    %668 = vmatprep.subr.mxu0 0.0
    %669 = vmatpush1.msra.mxu0 0.0
    %670 = vmatprep.subr.mxu0 0.0
    %671 = vmatpush1.msra.mxu0 0.0
    %672 = vmatprep.subr.mxu0 0.0
    %673 = vmatpush1.msra.mxu0 0.0
    %674 = vmatprep.subr.mxu0 0.0
    %675 = vmatpush1.msra.mxu0 0.0
    %676 = vmatprep.subr.mxu0 0.0
    %677 = vmatpush1.msra.mxu0 0.0
    %678 = vmatprep.subr.mxu0 0.0
    %679 = vmatpush1.msra.mxu0 0.0
    %680 = vmatprep.subr.mxu0 0.0
    %681 = vmatpush1.msra.mxu0 0.0
    %682 = vmatprep.subr.mxu0 0.0
    %683 = vmatpush1.msra.mxu0 0.0
    %684 = vmatprep.subr.mxu0 0.0
    %685 = vmatpush1.msra.mxu0 0.0
    %686 = vmatprep.subr.mxu0 0.0
    %687 = vmatpush1.msra.mxu0 0.0
    %688 = vmatprep.subr.mxu0 0.0
    %689 = vmatpush1.msra.mxu0 0.0
    %690 = vmatprep.subr.mxu0 0.0
    %691 = vmatpush1.msra.mxu0 0.0
    %692 = vmatprep.mubr.f32.mxu0 0.0
    %693 = vmatmul.mubr.f32.gmra.mrb[0].mxu0 %v596
    %v694 = vpop.f32.mrb[0].mxu0
    %v695 = vadd.f32 %v585, %v694
    %v696 = vpop.f32.mrb[0].mxu0
    %v697 = vadd.f32 %v585, %v696
    %698 = vmatprep.mubr.f32.mxu0 0.0
    %699 = vmatmul.mubr.f32.gmra.mrb[0].mxu0 %v599
    %v700 = vpop.f32.mrb[0].mxu0
    %v701 = vadd.f32 %v589, %v700
    %v702 = vpop.f32.mrb[0].mxu0
    %v703 = vadd.f32 %v589, %v702
    %704 = vmatprep.mubr.f32.mxu0 0.0
    %705 = vmatmul.mubr.f32.gmra.mrb[0].mxu0 %v602
    %v706 = vpop.f32.mrb[0].mxu0
    %v707 = vadd.f32 %v593, %v706
    %v708 = vpop.f32.mrb[0].mxu0
    %v709 = vadd.f32 %v593, %v708
    %710 = vdwg.mxu0
    %711 = vmatprep.subr.mxu0 %v558
    %712 = vmatpush1.msra.mxu0 %v557
    %713 = vmatprep.subr.mxu0 %v566
    %714 = vmatpush1.msra.mxu0 %v565
    %715 = vmatprep.subr.mxu0 %v614
    %716 = vmatpush1.msra.mxu0 %v611
    %717 = vmatprep.subr.mxu0 0.0
    %718 = vmatpush1.msra.mxu0 0.0
    %719 = vmatprep.subr.mxu0 0.0
    %720 = vmatpush1.msra.mxu0 0.0
    %721 = vmatprep.subr.mxu0 0.0
    %722 = vmatpush1.msra.mxu0 0.0
    %723 = vmatprep.subr.mxu0 0.0
    %724 = vmatpush1.msra.mxu0 0.0
    %725 = vmatprep.subr.mxu0 0.0
    %726 = vmatpush1.msra.mxu0 0.0
    %727 = vmatprep.subr.mxu0 0.0
    %728 = vmatpush1.msra.mxu0 0.0
    %729 = vmatprep.subr.mxu0 0.0
    %730 = vmatpush1.msra.mxu0 0.0
    %731 = vmatprep.subr.mxu0 0.0
    %732 = vmatpush1.msra.mxu0 0.0
    %733 = vmatprep.subr.mxu0 0.0
    %734 = vmatpush1.msra.mxu0 0.0
    %735 = vmatprep.subr.mxu0 0.0
    %736 = vmatpush1.msra.mxu0 0.0
    %737 = vmatprep.subr.mxu0 0.0
    %738 = vmatpush1.msra.mxu0 0.0
    %739 = vmatprep.subr.mxu0 0.0
    %740 = vmatpush1.msra.mxu0 0.0
    %741 = vmatprep.subr.mxu0 0.0
    %742 = vmatpush1.msra.mxu0 0.0
    %743 = vmatprep.subr.mxu0 0.0
    %744 = vmatpush1.msra.mxu0 0.0
    %745 = vmatprep.subr.mxu0 0.0
    %746 = vmatpush1.msra.mxu0 0.0
    %747 = vmatprep.subr.mxu0 0.0
    %748 = vmatpush1.msra.mxu0 0.0
    %749 = vmatprep.subr.mxu0 0.0
    %750 = vmatpush1.msra.mxu0 0.0
    %751 = vmatprep.subr.mxu0 0.0
    %752 = vmatpush1.msra.mxu0 0.0
    %753 = vmatprep.subr.mxu0 0.0
    %754 = vmatpush1.msra.mxu0 0.0
    %755 = vmatprep.subr.mxu0 0.0
    %756 = vmatpush1.msra.mxu0 0.0
    %757 = vmatprep.subr.mxu0 0.0
    %758 = vmatpush1.msra.mxu0 0.0
    %759 = vmatprep.subr.mxu0 0.0
    %760 = vmatpush1.msra.mxu0 0.0
    %761 = vmatprep.subr.mxu0 0.0
    %762 = vmatpush1.msra.mxu0 0.0
    %763 = vmatprep.subr.mxu0 0.0
    %764 = vmatpush1.msra.mxu0 0.0
    %765 = vmatprep.subr.mxu0 0.0
    %766 = vmatpush1.msra.mxu0 0.0
    %767 = vmatprep.subr.mxu0 0.0
    %768 = vmatpush1.msra.mxu0 0.0
    %769 = vmatprep.subr.mxu0 0.0
    %770 = vmatpush1.msra.mxu0 0.0
    %771 = vmatprep.subr.mxu0 0.0
    %772 = vmatpush1.msra.mxu0 0.0
    %773 = vmatprep.subr.mxu0 0.0
    %774 = vmatpush1.msra.mxu0 0.0
    %775 = vmatprep.mubr.f32.mxu0 0.0
    %776 = vmatmul.mubr.f32.gmra.mrb[0].mxu0 %v596
    %v777 = vpop.f32.mrb[0].mxu0
    %v778 = vadd.f32 %v585, %v777
    %v779 = vpop.f32.mrb[0].mxu0
    %v780 = vadd.f32 %v585, %v779
    %781 = vmatprep.mubr.f32.mxu0 0.0
    %782 = vmatmul.mubr.f32.gmra.mrb[0].mxu0 %v599
    %v783 = vpop.f32.mrb[0].mxu0
    %v784 = vadd.f32 %v589, %v783
    %v785 = vpop.f32.mrb[0].mxu0
    %v786 = vadd.f32 %v589, %v785
    %787 = vmatprep.mubr.f32.mxu0 0.0
    %788 = vmatmul.mubr.f32.gmra.mrb[0].mxu0 %v602
    %v789 = vpop.f32.mrb[0].mxu0
    %v790 = vadd.f32 %v593, %v789
    %v791 = vpop.f32.mrb[0].mxu0
    %v792 = vadd.f32 %v593, %v791
    %793 = vdwg.mxu0
    %794 = vmatprep.subr.mxu0 %v560
    %795 = vmatpush1.msra.mxu0 %v559
    %796 = vmatprep.subr.mxu0 %v568
    %797 = vmatpush1.msra.mxu0 %v567
    %798 = vmatprep.subr.mxu0 %v620
    %799 = vmatpush1.msra.mxu0 %v617
    %800 = vmatprep.subr.mxu0 0.0
    %801 = vmatpush1.msra.mxu0 0.0
    %802 = vmatprep.subr.mxu0 0.0
    %803 = vmatpush1.msra.mxu0 0.0
    %804 = vmatprep.subr.mxu0 0.0
    %805 = vmatpush1.msra.mxu0 0.0
    %806 = vmatprep.subr.mxu0 0.0
    %807 = vmatpush1.msra.mxu0 0.0
    %808 = vmatprep.subr.mxu0 0.0
    %809 = vmatpush1.msra.mxu0 0.0
    %810 = vmatprep.subr.mxu0 0.0
    %811 = vmatpush1.msra.mxu0 0.0
    %812 = vmatprep.subr.mxu0 0.0
    %813 = vmatpush1.msra.mxu0 0.0
    %814 = vmatprep.subr.mxu0 0.0
    %815 = vmatpush1.msra.mxu0 0.0
    %816 = vmatprep.subr.mxu0 0.0
    %817 = vmatpush1.msra.mxu0 0.0
    %818 = vmatprep.subr.mxu0 0.0
    %819 = vmatpush1.msra.mxu0 0.0
    %820 = vmatprep.subr.mxu0 0.0
    %821 = vmatpush1.msra.mxu0 0.0
    %822 = vmatprep.subr.mxu0 0.0
    %823 = vmatpush1.msra.mxu0 0.0
    %824 = vmatprep.subr.mxu0 0.0
    %825 = vmatpush1.msra.mxu0 0.0
    %826 = vmatprep.subr.mxu0 0.0
    %827 = vmatpush1.msra.mxu0 0.0
    %828 = vmatprep.subr.mxu0 0.0
    %829 = vmatpush1.msra.mxu0 0.0
    %830 = vmatprep.subr.mxu0 0.0
    %831 = vmatpush1.msra.mxu0 0.0
    %832 = vmatprep.subr.mxu0 0.0
    %833 = vmatpush1.msra.mxu0 0.0
    %834 = vmatprep.subr.mxu0 0.0
    %835 = vmatpush1.msra.mxu0 0.0
    %836 = vmatprep.subr.mxu0 0.0
    %837 = vmatpush1.msra.mxu0 0.0
    %838 = vmatprep.subr.mxu0 0.0
    %839 = vmatpush1.msra.mxu0 0.0
    %840 = vmatprep.subr.mxu0 0.0
    %841 = vmatpush1.msra.mxu0 0.0
    %842 = vmatprep.subr.mxu0 0.0
    %843 = vmatpush1.msra.mxu0 0.0
    %844 = vmatprep.subr.mxu0 0.0
    %845 = vmatpush1.msra.mxu0 0.0
    %846 = vmatprep.subr.mxu0 0.0
    %847 = vmatpush1.msra.mxu0 0.0
    %848 = vmatprep.subr.mxu0 0.0
    %849 = vmatpush1.msra.mxu0 0.0
    %850 = vmatprep.subr.mxu0 0.0
    %851 = vmatpush1.msra.mxu0 0.0
    %852 = vmatprep.subr.mxu0 0.0
    %853 = vmatpush1.msra.mxu0 0.0
    %854 = vmatprep.subr.mxu0 0.0
    %855 = vmatpush1.msra.mxu0 0.0
    %856 = vmatprep.subr.mxu0 0.0
    %857 = vmatpush1.msra.mxu0 0.0
    %858 = vmatprep.mubr.f32.mxu0 0.0
    %859 = vmatmul.mubr.f32.gmra.mrb[0].mxu0 %v596
    %v860 = vpop.f32.mrb[0].mxu0
    %v861 = vadd.f32 %v585, %v860
    %v862 = vpop.f32.mrb[0].mxu0
    %v863 = vadd.f32 %v585, %v862
    %864 = vmatprep.mubr.f32.mxu0 0.0
    %865 = vmatmul.mubr.f32.gmra.mrb[0].mxu0 %v599
    %v866 = vpop.f32.mrb[0].mxu0
    %v867 = vadd.f32 %v589, %v866
    %v868 = vpop.f32.mrb[0].mxu0
    %v869 = vadd.f32 %v589, %v868
    %870 = vmatprep.mubr.f32.mxu0 0.0
    %871 = vmatmul.mubr.f32.gmra.mrb[0].mxu0 %v602
    %v872 = vpop.f32.mrb[0].mxu0
    %v873 = vadd.f32 %v593, %v872
    %v874 = vpop.f32.mrb[0].mxu0
    %v875 = vadd.f32 %v593, %v874
    %876 = vdwg.mxu0
    %877 = vmatprep.subr.mxu0 %v562
    %878 = vmatpush1.msra.mxu0 %v561
    %879 = vmatprep.subr.mxu0 %v570
    %880 = vmatpush1.msra.mxu0 %v569
    %881 = vmatprep.subr.mxu0 %v626
    %882 = vmatpush1.msra.mxu0 %v623
    %883 = vmatprep.subr.mxu0 0.0
    %884 = vmatpush1.msra.mxu0 0.0
    %885 = vmatprep.subr.mxu0 0.0
    %886 = vmatpush1.msra.mxu0 0.0
    %887 = vmatprep.subr.mxu0 0.0
    %888 = vmatpush1.msra.mxu0 0.0
    %889 = vmatprep.subr.mxu0 0.0
    %890 = vmatpush1.msra.mxu0 0.0
    %891 = vmatprep.subr.mxu0 0.0
    %892 = vmatpush1.msra.mxu0 0.0
    %893 = vmatprep.subr.mxu0 0.0
    %894 = vmatpush1.msra.mxu0 0.0
    %895 = vmatprep.subr.mxu0 0.0
    %896 = vmatpush1.msra.mxu0 0.0
    %897 = vmatprep.subr.mxu0 0.0
    %898 = vmatpush1.msra.mxu0 0.0
    %899 = vmatprep.subr.mxu0 0.0
    %900 = vmatpush1.msra.mxu0 0.0
    %901 = vmatprep.subr.mxu0 0.0
    %902 = vmatpush1.msra.mxu0 0.0
    %903 = vmatprep.subr.mxu0 0.0
    %904 = vmatpush1.msra.mxu0 0.0
    %905 = vmatprep.subr.mxu0 0.0
    %906 = vmatpush1.msra.mxu0 0.0
    %907 = vmatprep.subr.mxu0 0.0
    %908 = vmatpush1.msra.mxu0 0.0
    %909 = vmatprep.subr.mxu0 0.0
    %910 = vmatpush1.msra.mxu0 0.0
    %911 = vmatprep.subr.mxu0 0.0
    %912 = vmatpush1.msra.mxu0 0.0
    %913 = vmatprep.subr.mxu0 0.0
    %914 = vmatpush1.msra.mxu0 0.0
    %915 = vmatprep.subr.mxu0 0.0
    %916 = vmatpush1.msra.mxu0 0.0
    %917 = vmatprep.subr.mxu0 0.0
    %918 = vmatpush1.msra.mxu0 0.0
    %919 = vmatprep.subr.mxu0 0.0
    %920 = vmatpush1.msra.mxu0 0.0
    %921 = vmatprep.subr.mxu0 0.0
    %922 = vmatpush1.msra.mxu0 0.0
    %923 = vmatprep.subr.mxu0 0.0
    %924 = vmatpush1.msra.mxu0 0.0
    %925 = vmatprep.subr.mxu0 0.0
    %926 = vmatpush1.msra.mxu0 0.0
    %927 = vmatprep.subr.mxu0 0.0
    %928 = vmatpush1.msra.mxu0 0.0
    %929 = vmatprep.subr.mxu0 0.0
    %930 = vmatpush1.msra.mxu0 0.0
    %931 = vmatprep.subr.mxu0 0.0
    %932 = vmatpush1.msra.mxu0 0.0
    %933 = vmatprep.subr.mxu0 0.0
    %934 = vmatpush1.msra.mxu0 0.0
    %935 = vmatprep.subr.mxu0 0.0
    %936 = vmatpush1.msra.mxu0 0.0
    %937 = vmatprep.subr.mxu0 0.0
    %938 = vmatpush1.msra.mxu0 0.0
    %939 = vmatprep.subr.mxu0 0.0
    %940 = vmatpush1.msra.mxu0 0.0
    %941 = vmatprep.mubr.f32.mxu0 0.0
    %942 = vmatmul.mubr.f32.gmra.mrb[0].mxu0 %v596
    %v943 = vpop.f32.mrb[0].mxu0
    %v944 = vadd.f32 %v585, %v943
    %v945 = vpop.f32.mrb[0].mxu0
    %v946 = vadd.f32 %v585, %v945
    %947 = vmatprep.mubr.f32.mxu0 0.0
    %948 = vmatmul.mubr.f32.gmra.mrb[0].mxu0 %v599
    %v949 = vpop.f32.mrb[0].mxu0
    %v950 = vadd.f32 %v589, %v949
    %v951 = vpop.f32.mrb[0].mxu0
    %v952 = vadd.f32 %v589, %v951
    %953 = vmatprep.mubr.f32.mxu0 0.0
    %954 = vmatmul.mubr.f32.gmra.mrb[0].mxu0 %v602
    %v955 = vpop.f32.mrb[0].mxu0
    %v956 = vadd.f32 %v593, %v955
    %v957 = vpop.f32.mrb[0].mxu0
    %v958 = vadd.f32 %v593, %v957
    %959 = vdwg.mxu0
    %v960 = vtanh.pop %v695
    %v961 = vtanh.pop %v697
    %v962 = vtanh.pop %v778
    %v963 = vtanh.pop %v780
    %v964 = vtanh.pop %v861
    %v965 = vtanh.pop %v863
    %v966 = vtanh.pop %v944
    %v967 = vtanh.pop %v946
    %v968 = vtanh.pop %v701
    %v969 = vtanh.pop %v703
    %v970 = vtanh.pop %v784
    %v971 = vtanh.pop %v786
    %v972 = vtanh.pop %v867
    %v973 = vtanh.pop %v869
    %v974 = vtanh.pop %v950
    %v975 = vtanh.pop %v952
    %v976 = vtanh.pop %v707
    %v977 = vtanh.pop %v709
    %v978 = vtanh.pop %v790
    %v979 = vtanh.pop %v792
    %v980 = vtanh.pop %v873
    %v981 = vtanh.pop %v875
    %v982 = vtanh.pop %v956
    %v983 = vtanh.pop %v958
    %s984 = scalar_lea.vmem [#allocation2], 48
    %v985 = vld [vmem:[%s984] sm:$0xff]
    %v986 = vld [vmem:[%s984 + $0x8] sm:$0xff]
    %v987 = vld [vmem:[%s984 + $0x10] sm:$0xf]
    %988 = vset.pattern.permute.xlu0 4
    %989 = vperm.xlu0 %988, %v30
    %v990 = vpop.permute.xlu0 %989
    %992 = vset.pattern.permute.xlu0 4
    %993 = vperm.xlu0 %992, %v31
    %v994 = vpop.permute.xlu0 %993
    %996 = vset.pattern.permute.xlu0 4
    %997 = vperm.xlu0 %996, %v32
    %v998 = vpop.permute.xlu0 %997
    %v1001 = vsel %vm188, %v985, 0
    %v1004 = vsel %vm188, %v986, 0
    %v1007 = vsel %vm188, %v987, 0
    %v1010 = vsel %vm198, %v976, 0
    %v1013 = vsel %vm198, %v977, 0
    %v1016 = vsel %vm198, %v978, 0
    %v1019 = vsel %vm198, %v979, 0
    %v1022 = vsel %vm198, %v980, 0
    %v1025 = vsel %vm198, %v981, 0
    %v1028 = vsel %vm198, %v982, 0
    %v1031 = vsel %vm198, %v983, 0
    %1033 = vmatprep.subr.mxu0 %v961
    %1034 = vmatpush1.msra.mxu0 %v960
    %1035 = vmatprep.subr.mxu0 %v969
    %1036 = vmatpush1.msra.mxu0 %v968
    %1037 = vmatprep.subr.mxu0 %v1013
    %1038 = vmatpush1.msra.mxu0 %v1010
    %1039 = vmatprep.subr.mxu0 0.0
    %1040 = vmatpush1.msra.mxu0 0.0
    %1041 = vmatprep.subr.mxu0 0.0
    %1042 = vmatpush1.msra.mxu0 0.0
    %1043 = vmatprep.subr.mxu0 0.0
    %1044 = vmatpush1.msra.mxu0 0.0
    %1045 = vmatprep.subr.mxu0 0.0
    %1046 = vmatpush1.msra.mxu0 0.0
    %1047 = vmatprep.subr.mxu0 0.0
    %1048 = vmatpush1.msra.mxu0 0.0
    %1049 = vmatprep.subr.mxu0 0.0
    %1050 = vmatpush1.msra.mxu0 0.0
    %1051 = vmatprep.subr.mxu0 0.0
    %1052 = vmatpush1.msra.mxu0 0.0
    %1053 = vmatprep.subr.mxu0 0.0
    %1054 = vmatpush1.msra.mxu0 0.0
    %1055 = vmatprep.subr.mxu0 0.0
    %1056 = vmatpush1.msra.mxu0 0.0
    %1057 = vmatprep.subr.mxu0 0.0
    %1058 = vmatpush1.msra.mxu0 0.0
    %1059 = vmatprep.subr.mxu0 0.0
    %1060 = vmatpush1.msra.mxu0 0.0
    %1061 = vmatprep.subr.mxu0 0.0
    %1062 = vmatpush1.msra.mxu0 0.0
    %1063 = vmatprep.subr.mxu0 0.0
    %1064 = vmatpush1.msra.mxu0 0.0
    %1065 = vmatprep.subr.mxu0 0.0
    %1066 = vmatpush1.msra.mxu0 0.0
    %1067 = vmatprep.subr.mxu0 0.0
    %1068 = vmatpush1.msra.mxu0 0.0
    %1069 = vmatprep.subr.mxu0 0.0
    %1070 = vmatpush1.msra.mxu0 0.0
    %1071 = vmatprep.subr.mxu0 0.0
    %1072 = vmatpush1.msra.mxu0 0.0
    %1073 = vmatprep.subr.mxu0 0.0
    %1074 = vmatpush1.msra.mxu0 0.0
    %1075 = vmatprep.subr.mxu0 0.0
    %1076 = vmatpush1.msra.mxu0 0.0
    %1077 = vmatprep.subr.mxu0 0.0
    %1078 = vmatpush1.msra.mxu0 0.0
    %1079 = vmatprep.subr.mxu0 0.0
    %1080 = vmatpush1.msra.mxu0 0.0
    %1081 = vmatprep.subr.mxu0 0.0
    %1082 = vmatpush1.msra.mxu0 0.0
    %1083 = vmatprep.subr.mxu0 0.0
    %1084 = vmatpush1.msra.mxu0 0.0
    %1085 = vmatprep.subr.mxu0 0.0
    %1086 = vmatpush1.msra.mxu0 0.0
    %1087 = vmatprep.subr.mxu0 0.0
    %1088 = vmatpush1.msra.mxu0 0.0
    %1089 = vmatprep.subr.mxu0 0.0
    %1090 = vmatpush1.msra.mxu0 0.0
    %1091 = vmatprep.subr.mxu0 0.0
    %1092 = vmatpush1.msra.mxu0 0.0
    %1093 = vmatprep.subr.mxu0 0.0
    %1094 = vmatpush1.msra.mxu0 0.0
    %1095 = vmatprep.subr.mxu0 0.0
    %1096 = vmatpush1.msra.mxu0 0.0
    %1097 = vmatprep.mubr.f32.mxu0 0.0
    %1098 = vmatmul.mubr.f32.gmra.mrb[0].mxu0 %v1001
    %v1099 = vpop.f32.mrb[0].mxu0
    %v1100 = vadd.f32 %v990, %v1099
    %v1101 = vpop.f32.mrb[0].mxu0
    %v1102 = vadd.f32 %v990, %v1101
    %1103 = vmatprep.mubr.f32.mxu0 0.0
    %1104 = vmatmul.mubr.f32.gmra.mrb[0].mxu0 %v1004
    %v1105 = vpop.f32.mrb[0].mxu0
    %v1106 = vadd.f32 %v994, %v1105
    %v1107 = vpop.f32.mrb[0].mxu0
    %v1108 = vadd.f32 %v994, %v1107
    %1109 = vmatprep.mubr.f32.mxu0 0.0
    %1110 = vmatmul.mubr.f32.gmra.mrb[0].mxu0 %v1007
    %v1111 = vpop.f32.mrb[0].mxu0
    %v1112 = vadd.f32 %v998, %v1111
    %v1113 = vpop.f32.mrb[0].mxu0
    %v1114 = vadd.f32 %v998, %v1113
    %1115 = vdwg.mxu0
    %1116 = vmatprep.subr.mxu0 %v963
    %1117 = vmatpush1.msra.mxu0 %v962
    %1118 = vmatprep.subr.mxu0 %v971
    %1119 = vmatpush1.msra.mxu0 %v970
    %1120 = vmatprep.subr.mxu0 %v1019
    %1121 = vmatpush1.msra.mxu0 %v1016
    %1122 = vmatprep.subr.mxu0 0.0
    %1123 = vmatpush1.msra.mxu0 0.0
    %1124 = vmatprep.subr.mxu0 0.0
    %1125 = vmatpush1.msra.mxu0 0.0
    %1126 = vmatprep.subr.mxu0 0.0
    %1127 = vmatpush1.msra.mxu0 0.0
    %1128 = vmatprep.subr.mxu0 0.0
    %1129 = vmatpush1.msra.mxu0 0.0
    %1130 = vmatprep.subr.mxu0 0.0
    %1131 = vmatpush1.msra.mxu0 0.0
    %1132 = vmatprep.subr.mxu0 0.0
    %1133 = vmatpush1.msra.mxu0 0.0
    %1134 = vmatprep.subr.mxu0 0.0
    %1135 = vmatpush1.msra.mxu0 0.0
    %1136 = vmatprep.subr.mxu0 0.0
    %1137 = vmatpush1.msra.mxu0 0.0
    %1138 = vmatprep.subr.mxu0 0.0
    %1139 = vmatpush1.msra.mxu0 0.0
    %1140 = vmatprep.subr.mxu0 0.0
    %1141 = vmatpush1.msra.mxu0 0.0
    %1142 = vmatprep.subr.mxu0 0.0
    %1143 = vmatpush1.msra.mxu0 0.0
    %1144 = vmatprep.subr.mxu0 0.0
    %1145 = vmatpush1.msra.mxu0 0.0
    %1146 = vmatprep.subr.mxu0 0.0
    %1147 = vmatpush1.msra.mxu0 0.0
    %1148 = vmatprep.subr.mxu0 0.0
    %1149 = vmatpush1.msra.mxu0 0.0
    %1150 = vmatprep.subr.mxu0 0.0
    %1151 = vmatpush1.msra.mxu0 0.0
    %1152 = vmatprep.subr.mxu0 0.0
    %1153 = vmatpush1.msra.mxu0 0.0
    %1154 = vmatprep.subr.mxu0 0.0
    %1155 = vmatpush1.msra.mxu0 0.0
    %1156 = vmatprep.subr.mxu0 0.0
    %1157 = vmatpush1.msra.mxu0 0.0
    %1158 = vmatprep.subr.mxu0 0.0
    %1159 = vmatpush1.msra.mxu0 0.0
    %1160 = vmatprep.subr.mxu0 0.0
    %1161 = vmatpush1.msra.mxu0 0.0
    %1162 = vmatprep.subr.mxu0 0.0
    %1163 = vmatpush1.msra.mxu0 0.0
    %1164 = vmatprep.subr.mxu0 0.0
    %1165 = vmatpush1.msra.mxu0 0.0
    %1166 = vmatprep.subr.mxu0 0.0
    %1167 = vmatpush1.msra.mxu0 0.0
    %1168 = vmatprep.subr.mxu0 0.0
    %1169 = vmatpush1.msra.mxu0 0.0
    %1170 = vmatprep.subr.mxu0 0.0
    %1171 = vmatpush1.msra.mxu0 0.0
    %1172 = vmatprep.subr.mxu0 0.0
    %1173 = vmatpush1.msra.mxu0 0.0
    %1174 = vmatprep.subr.mxu0 0.0
    %1175 = vmatpush1.msra.mxu0 0.0
    %1176 = vmatprep.subr.mxu0 0.0
    %1177 = vmatpush1.msra.mxu0 0.0
    %1178 = vmatprep.subr.mxu0 0.0
    %1179 = vmatpush1.msra.mxu0 0.0
    %1180 = vmatprep.mubr.f32.mxu0 0.0
    %1181 = vmatmul.mubr.f32.gmra.mrb[0].mxu0 %v1001
    %v1182 = vpop.f32.mrb[0].mxu0
    %v1183 = vadd.f32 %v990, %v1182
    %v1184 = vpop.f32.mrb[0].mxu0
    %v1185 = vadd.f32 %v990, %v1184
    %1186 = vmatprep.mubr.f32.mxu0 0.0
    %1187 = vmatmul.mubr.f32.gmra.mrb[0].mxu0 %v1004
    %v1188 = vpop.f32.mrb[0].mxu0
    %v1189 = vadd.f32 %v994, %v1188
    %v1190 = vpop.f32.mrb[0].mxu0
    %v1191 = vadd.f32 %v994, %v1190
    %1192 = vmatprep.mubr.f32.mxu0 0.0
    %1193 = vmatmul.mubr.f32.gmra.mrb[0].mxu0 %v1007
    %v1194 = vpop.f32.mrb[0].mxu0
    %v1195 = vadd.f32 %v998, %v1194
    %v1196 = vpop.f32.mrb[0].mxu0
    %v1197 = vadd.f32 %v998, %v1196
    %1198 = vdwg.mxu0
    %1199 = vmatprep.subr.mxu0 %v965
    %1200 = vmatpush1.msra.mxu0 %v964
    %1201 = vmatprep.subr.mxu0 %v973
    %1202 = vmatpush1.msra.mxu0 %v972
    %1203 = vmatprep.subr.mxu0 %v1025
    %1204 = vmatpush1.msra.mxu0 %v1022
    %1205 = vmatprep.subr.mxu0 0.0
    %1206 = vmatpush1.msra.mxu0 0.0
    %1207 = vmatprep.subr.mxu0 0.0
    %1208 = vmatpush1.msra.mxu0 0.0
    %1209 = vmatprep.subr.mxu0 0.0
    %1210 = vmatpush1.msra.mxu0 0.0
    %1211 = vmatprep.subr.mxu0 0.0
    %1212 = vmatpush1.msra.mxu0 0.0
    %1213 = vmatprep.subr.mxu0 0.0
    %1214 = vmatpush1.msra.mxu0 0.0
    %1215 = vmatprep.subr.mxu0 0.0
    %1216 = vmatpush1.msra.mxu0 0.0
    %1217 = vmatprep.subr.mxu0 0.0
    %1218 = vmatpush1.msra.mxu0 0.0
    %1219 = vmatprep.subr.mxu0 0.0
    %1220 = vmatpush1.msra.mxu0 0.0
    %1221 = vmatprep.subr.mxu0 0.0
    %1222 = vmatpush1.msra.mxu0 0.0
    %1223 = vmatprep.subr.mxu0 0.0
    %1224 = vmatpush1.msra.mxu0 0.0
    %1225 = vmatprep.subr.mxu0 0.0
    %1226 = vmatpush1.msra.mxu0 0.0
    %1227 = vmatprep.subr.mxu0 0.0
    %1228 = vmatpush1.msra.mxu0 0.0
    %1229 = vmatprep.subr.mxu0 0.0
    %1230 = vmatpush1.msra.mxu0 0.0
    %1231 = vmatprep.subr.mxu0 0.0
    %1232 = vmatpush1.msra.mxu0 0.0
    %1233 = vmatprep.subr.mxu0 0.0
    %1234 = vmatpush1.msra.mxu0 0.0
    %1235 = vmatprep.subr.mxu0 0.0
    %1236 = vmatpush1.msra.mxu0 0.0
    %1237 = vmatprep.subr.mxu0 0.0
    %1238 = vmatpush1.msra.mxu0 0.0
    %1239 = vmatprep.subr.mxu0 0.0
    %1240 = vmatpush1.msra.mxu0 0.0
    %1241 = vmatprep.subr.mxu0 0.0
    %1242 = vmatpush1.msra.mxu0 0.0
    %1243 = vmatprep.subr.mxu0 0.0
    %1244 = vmatpush1.msra.mxu0 0.0
    %1245 = vmatprep.subr.mxu0 0.0
    %1246 = vmatpush1.msra.mxu0 0.0
    %1247 = vmatprep.subr.mxu0 0.0
    %1248 = vmatpush1.msra.mxu0 0.0
    %1249 = vmatprep.subr.mxu0 0.0
    %1250 = vmatpush1.msra.mxu0 0.0
    %1251 = vmatprep.subr.mxu0 0.0
    %1252 = vmatpush1.msra.mxu0 0.0
    %1253 = vmatprep.subr.mxu0 0.0
    %1254 = vmatpush1.msra.mxu0 0.0
    %1255 = vmatprep.subr.mxu0 0.0
    %1256 = vmatpush1.msra.mxu0 0.0
    %1257 = vmatprep.subr.mxu0 0.0
    %1258 = vmatpush1.msra.mxu0 0.0
    %1259 = vmatprep.subr.mxu0 0.0
    %1260 = vmatpush1.msra.mxu0 0.0
    %1261 = vmatprep.subr.mxu0 0.0
    %1262 = vmatpush1.msra.mxu0 0.0
    %1263 = vmatprep.mubr.f32.mxu0 0.0
    %1264 = vmatmul.mubr.f32.gmra.mrb[0].mxu0 %v1001
    %v1265 = vpop.f32.mrb[0].mxu0
    %v1266 = vadd.f32 %v990, %v1265
    %v1267 = vpop.f32.mrb[0].mxu0
    %v1268 = vadd.f32 %v990, %v1267
    %1269 = vmatprep.mubr.f32.mxu0 0.0
    %1270 = vmatmul.mubr.f32.gmra.mrb[0].mxu0 %v1004
    %v1271 = vpop.f32.mrb[0].mxu0
    %v1272 = vadd.f32 %v994, %v1271
    %v1273 = vpop.f32.mrb[0].mxu0
    %v1274 = vadd.f32 %v994, %v1273
    %1275 = vmatprep.mubr.f32.mxu0 0.0
    %1276 = vmatmul.mubr.f32.gmra.mrb[0].mxu0 %v1007
    %v1277 = vpop.f32.mrb[0].mxu0
    %v1278 = vadd.f32 %v998, %v1277
    %v1279 = vpop.f32.mrb[0].mxu0
    %v1280 = vadd.f32 %v998, %v1279
    %1281 = vdwg.mxu0
    %1282 = vmatprep.subr.mxu0 %v967
    %1283 = vmatpush1.msra.mxu0 %v966
    %1284 = vmatprep.subr.mxu0 %v975
    %1285 = vmatpush1.msra.mxu0 %v974
    %1286 = vmatprep.subr.mxu0 %v1031
    %1287 = vmatpush1.msra.mxu0 %v1028
    %1288 = vmatprep.subr.mxu0 0.0
    %1289 = vmatpush1.msra.mxu0 0.0
    %1290 = vmatprep.subr.mxu0 0.0
    %1291 = vmatpush1.msra.mxu0 0.0
    %1292 = vmatprep.subr.mxu0 0.0
    %1293 = vmatpush1.msra.mxu0 0.0
    %1294 = vmatprep.subr.mxu0 0.0
    %1295 = vmatpush1.msra.mxu0 0.0
    %1296 = vmatprep.subr.mxu0 0.0
    %1297 = vmatpush1.msra.mxu0 0.0
    %1298 = vmatprep.subr.mxu0 0.0
    %1299 = vmatpush1.msra.mxu0 0.0
    %1300 = vmatprep.subr.mxu0 0.0
    %1301 = vmatpush1.msra.mxu0 0.0
    %1302 = vmatprep.subr.mxu0 0.0
    %1303 = vmatpush1.msra.mxu0 0.0
    %1304 = vmatprep.subr.mxu0 0.0
    %1305 = vmatpush1.msra.mxu0 0.0
    %1306 = vmatprep.subr.mxu0 0.0
    %1307 = vmatpush1.msra.mxu0 0.0
    %1308 = vmatprep.subr.mxu0 0.0
    %1309 = vmatpush1.msra.mxu0 0.0
    %1310 = vmatprep.subr.mxu0 0.0
    %1311 = vmatpush1.msra.mxu0 0.0
    %1312 = vmatprep.subr.mxu0 0.0
    %1313 = vmatpush1.msra.mxu0 0.0
    %1314 = vmatprep.subr.mxu0 0.0
    %1315 = vmatpush1.msra.mxu0 0.0
    %1316 = vmatprep.subr.mxu0 0.0
    %1317 = vmatpush1.msra.mxu0 0.0
    %1318 = vmatprep.subr.mxu0 0.0
    %1319 = vmatpush1.msra.mxu0 0.0
    %1320 = vmatprep.subr.mxu0 0.0
    %1321 = vmatpush1.msra.mxu0 0.0
    %1322 = vmatprep.subr.mxu0 0.0
    %1323 = vmatpush1.msra.mxu0 0.0
    %1324 = vmatprep.subr.mxu0 0.0
    %1325 = vmatpush1.msra.mxu0 0.0
    %1326 = vmatprep.subr.mxu0 0.0
    %1327 = vmatpush1.msra.mxu0 0.0
    %1328 = vmatprep.subr.mxu0 0.0
    %1329 = vmatpush1.msra.mxu0 0.0
    %1330 = vmatprep.subr.mxu0 0.0
    %1331 = vmatpush1.msra.mxu0 0.0
    %1332 = vmatprep.subr.mxu0 0.0
    %1333 = vmatpush1.msra.mxu0 0.0
    %1334 = vmatprep.subr.mxu0 0.0
    %1335 = vmatpush1.msra.mxu0 0.0
    %1336 = vmatprep.subr.mxu0 0.0
    %1337 = vmatpush1.msra.mxu0 0.0
    %1338 = vmatprep.subr.mxu0 0.0
    %1339 = vmatpush1.msra.mxu0 0.0
    %1340 = vmatprep.subr.mxu0 0.0
    %1341 = vmatpush1.msra.mxu0 0.0
    %1342 = vmatprep.subr.mxu0 0.0
    %1343 = vmatpush1.msra.mxu0 0.0
    %1344 = vmatprep.subr.mxu0 0.0
    %1345 = vmatpush1.msra.mxu0 0.0
    %1346 = vmatprep.mubr.f32.mxu0 0.0
    %1347 = vmatmul.mubr.f32.gmra.mrb[0].mxu0 %v1001
    %v1348 = vpop.f32.mrb[0].mxu0
    %v1349 = vadd.f32 %v990, %v1348
    %v1350 = vpop.f32.mrb[0].mxu0
    %v1351 = vadd.f32 %v990, %v1350
    %1352 = vmatprep.mubr.f32.mxu0 0.0
    %1353 = vmatmul.mubr.f32.gmra.mrb[0].mxu0 %v1004
    %v1354 = vpop.f32.mrb[0].mxu0
    %v1355 = vadd.f32 %v994, %v1354
    %v1356 = vpop.f32.mrb[0].mxu0
    %v1357 = vadd.f32 %v994, %v1356
    %1358 = vmatprep.mubr.f32.mxu0 0.0
    %1359 = vmatmul.mubr.f32.gmra.mrb[0].mxu0 %v1007
    %v1360 = vpop.f32.mrb[0].mxu0
    %v1361 = vadd.f32 %v998, %v1360
    %v1362 = vpop.f32.mrb[0].mxu0
    %v1363 = vadd.f32 %v998, %v1362
    %1364 = vdwg.mxu0
    %v1365 = vtanh.pop %v1100
    %v1366 = vtanh.pop %v1102
    %v1367 = vtanh.pop %v1183
    %v1368 = vtanh.pop %v1185
    %v1369 = vtanh.pop %v1266
    %v1370 = vtanh.pop %v1268
    %v1371 = vtanh.pop %v1349
    %v1372 = vtanh.pop %v1351
    %v1373 = vtanh.pop %v1106
    %v1374 = vtanh.pop %v1108
    %v1375 = vtanh.pop %v1189
    %v1376 = vtanh.pop %v1191
    %v1377 = vtanh.pop %v1272
    %v1378 = vtanh.pop %v1274
    %v1379 = vtanh.pop %v1355
    %v1380 = vtanh.pop %v1357
    %v1381 = vtanh.pop %v1112
    %v1382 = vtanh.pop %v1114
    %v1383 = vtanh.pop %v1195
    %v1384 = vtanh.pop %v1197
    %v1385 = vtanh.pop %v1278
    %v1386 = vtanh.pop %v1280
    %v1387 = vtanh.pop %v1361
    %v1388 = vtanh.pop %v1363
    %1389 = vset.pattern.permute.xlu0 5
    %1390 = vperm.xlu0 %1389, %v30
    %v1391 = vpop.permute.xlu0 %1390
    %1393 = vset.pattern.permute.xlu0 5
    %1394 = vperm.xlu0 %1393, %v31
    %v1395 = vpop.permute.xlu0 %1394
    %1397 = vset.pattern.permute.xlu0 5
    %1398 = vperm.xlu0 %1397, %v32
    %v1399 = vpop.permute.xlu0 %1398
    %v1401 = vmul.f32 %v1391, %v1365
    %v1402 = vmul.f32 %v1391, %v1366
    %v1403 = vmul.f32 %v1391, %v1367
    %v1404 = vmul.f32 %v1391, %v1368
    %v1405 = vmul.f32 %v1391, %v1369
    %v1406 = vmul.f32 %v1391, %v1370
    %v1407 = vmul.f32 %v1391, %v1371
    %v1408 = vmul.f32 %v1391, %v1372
    %v1409 = vmul.f32 %v1395, %v1373
    %v1410 = vmul.f32 %v1395, %v1374
    %v1411 = vmul.f32 %v1395, %v1375
    %v1412 = vmul.f32 %v1395, %v1376
    %v1413 = vmul.f32 %v1395, %v1377
    %v1414 = vmul.f32 %v1395, %v1378
    %v1415 = vmul.f32 %v1395, %v1379
    %v1416 = vmul.f32 %v1395, %v1380
    %v1417 = vmul.f32 %v1399, %v1381
    %v1418 = vmul.f32 %v1399, %v1382
    %v1419 = vmul.f32 %v1399, %v1383
    %v1420 = vmul.f32 %v1399, %v1384
    %v1421 = vmul.f32 %v1399, %v1385
    %v1422 = vmul.f32 %v1399, %v1386
    %v1423 = vmul.f32 %v1399, %v1387
    %v1424 = vmul.f32 %v1399, %v1388
    %v1425 = vadd.f32 %v1401, %v1409
    %v1426 = vsel %vm198, %v1417, 0.0
    %v1427 = vadd.f32 %v1425, %v1426
    %v1428 = vrot.slane %v1427, 4
    %v1429 = vadd.f32 %v1427, %v1428
    %v1430 = vrot.slane %v1429, 2
    %v1431 = vadd.f32 %v1429, %v1430
    %v1432 = vrot.slane %v1431, 1
    %v1433 = vadd.f32 %v1431, %v1432
    %v1434 = vadd.f32 %v1402, %v1410
    %v1435 = vsel %vm198, %v1418, 0.0
    %v1436 = vadd.f32 %v1434, %v1435
    %v1437 = vrot.slane %v1436, 4
    %v1438 = vadd.f32 %v1436, %v1437
    %v1439 = vrot.slane %v1438, 2
    %v1440 = vadd.f32 %v1438, %v1439
    %v1441 = vrot.slane %v1440, 1
    %v1442 = vadd.f32 %v1440, %v1441
    %v1443 = vadd.f32 %v1403, %v1411
    %v1444 = vsel %vm198, %v1419, 0.0
    %v1445 = vadd.f32 %v1443, %v1444
    %v1446 = vrot.slane %v1445, 4
    %v1447 = vadd.f32 %v1445, %v1446
    %v1448 = vrot.slane %v1447, 2
    %v1449 = vadd.f32 %v1447, %v1448
    %v1450 = vrot.slane %v1449, 1
    %v1451 = vadd.f32 %v1449, %v1450
    %v1452 = vadd.f32 %v1404, %v1412
    %v1453 = vsel %vm198, %v1420, 0.0
    %v1454 = vadd.f32 %v1452, %v1453
    %v1455 = vrot.slane %v1454, 4
    %v1456 = vadd.f32 %v1454, %v1455
    %v1457 = vrot.slane %v1456, 2
    %v1458 = vadd.f32 %v1456, %v1457
    %v1459 = vrot.slane %v1458, 1
    %v1460 = vadd.f32 %v1458, %v1459
    %v1461 = vadd.f32 %v1405, %v1413
    %v1462 = vsel %vm198, %v1421, 0.0
    %v1463 = vadd.f32 %v1461, %v1462
    %v1464 = vrot.slane %v1463, 4
    %v1465 = vadd.f32 %v1463, %v1464
    %v1466 = vrot.slane %v1465, 2
    %v1467 = vadd.f32 %v1465, %v1466
    %v1468 = vrot.slane %v1467, 1
    %v1469 = vadd.f32 %v1467, %v1468
    %v1470 = vadd.f32 %v1406, %v1414
    %v1471 = vsel %vm198, %v1422, 0.0
    %v1472 = vadd.f32 %v1470, %v1471
    %v1473 = vrot.slane %v1472, 4
    %v1474 = vadd.f32 %v1472, %v1473
    %v1475 = vrot.slane %v1474, 2
    %v1476 = vadd.f32 %v1474, %v1475
    %v1477 = vrot.slane %v1476, 1
    %v1478 = vadd.f32 %v1476, %v1477
    %v1479 = vadd.f32 %v1407, %v1415
    %v1480 = vsel %vm198, %v1423, 0.0
    %v1481 = vadd.f32 %v1479, %v1480
    %v1482 = vrot.slane %v1481, 4
    %v1483 = vadd.f32 %v1481, %v1482
    %v1484 = vrot.slane %v1483, 2
    %v1485 = vadd.f32 %v1483, %v1484
    %v1486 = vrot.slane %v1485, 1
    %v1487 = vadd.f32 %v1485, %v1486
    %v1488 = vadd.f32 %v1408, %v1416
    %v1489 = vsel %vm198, %v1424, 0.0
    %v1490 = vadd.f32 %v1488, %v1489
    %v1491 = vrot.slane %v1490, 4
    %v1492 = vadd.f32 %v1490, %v1491
    %v1493 = vrot.slane %v1492, 2
    %v1494 = vadd.f32 %v1492, %v1493
    %v1495 = vrot.slane %v1494, 1
    %v1496 = vadd.f32 %v1494, %v1495
    %1497 = vset.pattern.permute.xlu0 6
    %1498 = vperm.xlu0 %1497, %v30
    %v1499 = vpop.permute.xlu0 %1498
    %v1501 = vadd.f32 %v1433, %v1499
    %v1502 = vadd.f32 %v1442, %v1499
    %v1503 = vadd.f32 %v1451, %v1499
    %v1504 = vadd.f32 %v1460, %v1499
    %v1505 = vadd.f32 %v1469, %v1499
    %v1506 = vadd.f32 %v1478, %v1499
    %v1507 = vadd.f32 %v1487, %v1499
    %v1508 = vadd.f32 %v1496, %v1499
    %v1517 = vcombine.low %v1501, %v1502
    %v1518 = vcombine.low %v1503, %v1504
    %v1519 = vcombine.low %v1505, %v1506
    %v1520 = vcombine.low %v1507, %v1508
    %v1522 = vunpack.c.l.s4 1966171168
    %v1523 = vunpack.c.0.s8 %v1522
    %v1524 = vlaneseq
    %v1525 = vshrl.u32 %v1524, 7
    %v1526 = vsub.s32 %v1523, %v1525
    %v1527 = vrot.slane %v1517, %v1526
    %v1529 = vunpack.c.l.s4 1966171168
    %v1530 = vunpack.c.0.s8 %v1529
    %v1531 = vlaneseq
    %v1532 = vshrl.u32 %v1531, 7
    %v1533 = vsub.s32 %v1530, %v1532
    %v1534 = vrot.slane %v1518, %v1533
    %v1536 = vunpack.c.l.s4 1966171168
    %v1537 = vunpack.c.0.s8 %v1536
    %v1538 = vlaneseq
    %v1539 = vshrl.u32 %v1538, 7
    %v1540 = vsub.s32 %v1537, %v1539
    %v1541 = vrot.slane %v1519, %v1540
    %v1543 = vunpack.c.l.s4 1966171168
    %v1544 = vunpack.c.0.s8 %v1543
    %v1545 = vlaneseq
    %v1546 = vshrl.u32 %v1545, 7
    %v1547 = vsub.s32 %v1544, %v1546
    %v1548 = vrot.slane %v1520, %v1547
    %v1549 = vcombine.low %v1527, %v1534
    %v1550 = vcombine.low %v1541, %v1548
    %v1552 = vunpack.c.l.s4 1966171168
    %v1553 = vunpack.c.0.s8 %v1552
    %v1554 = vlaneseq
    %v1555 = vshrl.u32 %v1554, 7
    %v1556 = vsub.s32 %v1553, %v1555
    %v1557 = vrot.slane %v1549, %v1556
    %v1559 = vunpack.c.l.s4 1966171168
    %v1560 = vunpack.c.0.s8 %v1559
    %v1561 = vlaneseq
    %v1562 = vshrl.u32 %v1561, 7
    %v1563 = vsub.s32 %v1560, %v1562
    %v1564 = vrot.slane %v1550, %v1563
    %v1565 = vcombine.low %v1557, %v1564
    %1567 = vst [vmem:[#allocation5] sm:$0xff] %v1565
    // Predicated region
    $region18: #{tpu_custom_call.1} parent=1 // pred_check
      _
    $region19: #{tpu_custom_call.1} parent=1 // pred_check_branch
      %1569 = sbr.rel (0) target = $region21
    $region20: #{tpu_custom_call.1} parent=1 // pred_region
      %s1571 = ssub.s32 128, 128
      %1572 = vsyncadd [#allocation4], %s1571
      %s1574 = sshll.u32 [#allocation5], 4
      %s1575 = int_to_ptr.vmem [resolvable:$true] %s1574
      %1577 = dma.vmem_to_hbm [thread:$0]  %s1575, 128, %s3, [#allocation4]
    $region21: #{tpu_custom_call.1} parent=1 // pred_fallthru
      _
    // Predicated region
    $region22: #{tpu_custom_call.1} parent=1 // pred_check
      _
    $region23: #{tpu_custom_call.1} parent=1 // pred_check_branch
      %1579 = sbr.rel (0) target = $region25
    $region24: #{tpu_custom_call.1} parent=1 // pred_region
      %1580 = dma.done [#allocation4], 128
    $region25: #{tpu_custom_call.1} parent=1 // pred_fallthru
      _
    %1581 = vsyncpa [#allocation3], 1
    %1582 = vsyncpa [#allocation4], 1

</llo_original>
